<compile_context>
chip_gen: v5e
topology: v5e:2x2
jax: 0.10.0
libtpu: 0.0.40
codegen_flags: <defaults>
</compile_context>

<pallas_src>
import functools
import math

import jax
import jax.numpy as jnp
from jax.experimental import pallas as pl
from jax.experimental.pallas import tpu as pltpu

_LANE = 128


def _round_up(n, m):
    return ((n + m - 1) // m) * m


def _fused_mlp_kernel(*refs, num_layers):
    """Fused MLP: refs = (x, w0, b0, ..., w{L-1}, b{L-1}, out).

    x tile: (tm, Din_p) f32.  Weights (Din_p, Dout_p) in MXU dtype (bf16/f32),
    biases (1, Dout_p) f32.  The running activation `h` lives in vregs/VMEM
    for the whole layer chain; only the final layer writes the output ref.
    """
    x_ref = refs[0]
    o_ref = refs[1 + 2 * num_layers]

    h = x_ref[...]  # (tm, Din_p) float32
    for layer in range(num_layers):
        w = refs[1 + 2 * layer][...]          # (Din_p, Dout_p), bf16 or f32
        b = refs[2 + 2 * layer][...]          # (1, Dout_p), f32
        # MXU matmul with f32 accumulation; activation cast to weight dtype.
        y = jnp.dot(h.astype(w.dtype), w, preferred_element_type=jnp.float32)
        y = y + b                             # f32 epilogue (v5e-safe)
        if layer < num_layers - 1:
            # leaky_relu(negative_slope=0.01) == max(y, 0.01*y): single vmax.
            h = jnp.maximum(y, jnp.float32(0.01) * y)
        else:
            o_ref[...] = y.astype(o_ref.dtype)


def encoder_forward(params, x, *, mxu_dtype=jnp.bfloat16, tm_max=256):
    """Fused Pallas forward pass.  params = [(w(in,out), b(1,out)), ...]."""
    B, input_dim = x.shape
    num_layers = len(params)
    output_dim = params[-1][0].shape[1]

    in_dims = [params[l][0].shape[0] for l in range(num_layers)]
    out_dims = [params[l][0].shape[1] for l in range(num_layers)]
    assert in_dims[0] == input_dim

    # Lane-dense padding of all feature dims.
    in_p = [_round_up(d, _LANE) for d in in_dims]
    out_p = [_round_up(d, _LANE) for d in out_dims]

    # Batch tiling: tm is a multiple of 8, at most tm_max.
    bp8 = _round_up(B, 8)
    tm = min(tm_max, bp8)
    Bp = _round_up(B, tm)
    num_tiles = Bp // tm

    # Pad + pack operands (weights cast to the MXU dtype, biases stay f32).
    x_p = jnp.pad(x.astype(jnp.float32),
                  ((0, Bp - B), (0, in_p[0] - in_dims[0])))
    packed = []
    for l, (w, b) in enumerate(params):
        w_p = jnp.pad(w, ((0, in_p[l] - in_dims[l]),
                          (0, out_p[l] - out_dims[l])))
        b_p = jnp.pad(b, ((0, 0), (0, out_p[l] - out_dims[l])))
        packed.append(w_p.astype(mxu_dtype))
        packed.append(b_p.astype(jnp.float32))

    # BlockSpecs: x/out tiled over batch; weights/biases resident (block (0,0)).
    in_specs = [pl.BlockSpec((tm, in_p[0]), lambda i: (i, 0))]
    for l in range(num_layers):
        in_specs.append(pl.BlockSpec((in_p[l], out_p[l]), lambda i: (0, 0)))
        in_specs.append(pl.BlockSpec((1, out_p[l]), lambda i: (0, 0)))
    out_specs = pl.BlockSpec((tm, out_p[-1]), lambda i: (i, 0))

    # Advisory cost estimate for the XLA scheduler.
    flops = 2 * Bp * sum(ip * op for ip, op in zip(in_p, out_p))
    param_bytes = sum(a.size * a.dtype.itemsize for a in packed)
    bytes_accessed = (x_p.size * 4) + param_bytes + (Bp * out_p[-1] * 4)
    cost = pl.CostEstimate(flops=flops, transcendentals=0,
                           bytes_accessed=bytes_accessed)

    # VMEM footprint estimate: double-buffered x/out tiles + resident params
    # + widest intermediate activation.  Raise the limit only if needed and
    # cap comfortably below v7x's 64 MiB physical VMEM.
    vmem_est = (2 * 4 * tm * (in_p[0] + out_p[-1])
                + 2 * param_bytes
                + 4 * tm * max(out_p))
    vmem_limit = min(56 * 1024 * 1024,
                     max(32 * 1024 * 1024, int(1.5 * vmem_est)))

    kernel = functools.partial(_fused_mlp_kernel, num_layers=num_layers)
    out_padded = pl.pallas_call(
        kernel,
        out_shape=jax.ShapeDtypeStruct((Bp, out_p[-1]), jnp.float32),
        grid=(num_tiles,),
        in_specs=in_specs,
        out_specs=out_specs,
        compiler_params=pltpu.CompilerParams(
            dimension_semantics=("parallel",),   # megacore sharding
            vmem_limit_bytes=vmem_limit,
        ),
        cost_estimate=cost,
    )(x_p, *packed)

    return out_padded[:B, :output_dim]


def init_encoder_params(key, input_dim, num_hidden, output_dim):
    """Deterministic init mimicking nn.Linear's U(-1/sqrt(fan_in), 1/sqrt(fan_in)).

    Weights stored as (in, out) so the kernel computes y = x @ W + b (the
    transpose of PyTorch's (out, in) layout; semantics identical).
    """
    hidden_dim = 3 * input_dim
    dims = [input_dim] + [hidden_dim] * num_hidden + [output_dim]
    params = []
    for layer_idx in range(len(dims) - 1):
        fan_in, fan_out = dims[layer_idx], dims[layer_idx + 1]
        key, kw, kb = jax.random.split(key, 3)
        bound = 1.0 / math.sqrt(fan_in)
        w = jax.random.uniform(kw, (fan_in, fan_out), jnp.float32,
                               minval=-bound, maxval=bound)
        b = jax.random.uniform(kb, (1, fan_out), jnp.float32,
                               minval=-bound, maxval=bound)
        params.append((w, b))
    return params


def encoder_forward_ref(params, x, mxu_dtype=jnp.float32):
    """Pure-JAX reference (optionally with the same bf16-input matmul)."""
    h = x
    for w, b in params[:-1]:
        y = jnp.dot(h.astype(mxu_dtype), w.astype(mxu_dtype),
                    preferred_element_type=jnp.float32) + b
        h = jnp.where(y > 0, y, 0.01 * y)
    w, b = params[-1]
    return jnp.dot(h.astype(mxu_dtype), w.astype(mxu_dtype),
                   preferred_element_type=jnp.float32) + b


if __name__ == "__main__":
    # Small shapes consistent with the module.
    batch = 8
    input_dim = 32
    num_hidden = 2
    output_dim = 16

    key = jax.random.PRNGKey(0)
    key, kx = jax.random.split(key)
    x = jax.random.normal(kx, (batch, input_dim), dtype=jnp.float32)
    params = init_encoder_params(key, input_dim, num_hidden, output_dim)

    ref_f32 = encoder_forward_ref(params, x)

    # 1) f32 MXU path: tight check against the pure-f32 reference.
    out_f32 = jax.block_until_ready(
        encoder_forward(params, x, mxu_dtype=jnp.float32))
    assert out_f32.shape == (batch, output_dim), out_f32.shape
    assert jnp.allclose(out_f32, ref_f32, atol=1e-3, rtol=1e-3), (
        "Pallas f32 output mismatch vs JAX reference")

    # 2) bf16-MXU path (perf default for v6e/v7x): check against a
    #    precision-matched reference, plus a coarse check vs the f32 reference.
    out_bf16 = jax.block_until_ready(encoder_forward(params, x))
    ref_bf16 = encoder_forward_ref(params, x, mxu_dtype=jnp.bfloat16)
    assert out_bf16.shape == (batch, output_dim), out_bf16.shape
    assert jnp.allclose(out_bf16, ref_bf16, atol=1e-3, rtol=1e-3), (
        "Pallas bf16 output mismatch vs precision-matched JAX reference")
    assert jnp.allclose(out_bf16, ref_f32, atol=1e-1, rtol=1e-1), (
        "Pallas bf16 output too far from f32 reference")

    print("KERNEL_OK")
</pallas_src>

<mosaic_0001>
module attributes {stable_mosaic.version = 11 : i64} {
  func.func @_fused_mlp_kernel(%arg0: i32, %arg1: memref<8x128xf32, #tpu.memory_space<vmem>>, %arg2: memref<128x128xf32, #tpu.memory_space<vmem>>, %arg3: memref<1x128xf32, #tpu.memory_space<vmem>>, %arg4: memref<128x128xf32, #tpu.memory_space<vmem>>, %arg5: memref<1x128xf32, #tpu.memory_space<vmem>>, %arg6: memref<128x128xf32, #tpu.memory_space<vmem>>, %arg7: memref<1x128xf32, #tpu.memory_space<vmem>>, %arg8: memref<8x128xf32, #tpu.memory_space<vmem>>) attributes {dimension_semantics = [#tpu.dimension_semantics<parallel>], iteration_bounds = array<i64: 1>, scalar_prefetch = 0 : i64, scratch_operands = 0 : i64, tpu.core_type = #tpu.core_type<tc>, window_params = [{transform_indices = @transform_0, window_bounds = array<i64: 8, 128>}, {pipeline_mode = #tpu.pipeline_mode<synchronous>, transform_indices = @transform_1, window_bounds = array<i64: 128, 128>}, {pipeline_mode = #tpu.pipeline_mode<synchronous>, transform_indices = @transform_2, window_bounds = array<i64: 1, 128>}, {pipeline_mode = #tpu.pipeline_mode<synchronous>, transform_indices = @transform_3, window_bounds = array<i64: 128, 128>}, {pipeline_mode = #tpu.pipeline_mode<synchronous>, transform_indices = @transform_4, window_bounds = array<i64: 1, 128>}, {pipeline_mode = #tpu.pipeline_mode<synchronous>, transform_indices = @transform_5, window_bounds = array<i64: 128, 128>}, {pipeline_mode = #tpu.pipeline_mode<synchronous>, transform_indices = @transform_6, window_bounds = array<i64: 1, 128>}, {transform_indices = @transform_7, window_bounds = array<i64: 8, 128>}]} {
    %c0 = arith.constant 0 : index
    %c0_0 = arith.constant 0 : index
    %0 = vector.load %arg1[%c0, %c0_0] : memref<8x128xf32, #tpu.memory_space<vmem>>, vector<8x128xf32>
    %c0_1 = arith.constant 0 : index
    %c0_2 = arith.constant 0 : index
    %1 = vector.load %arg2[%c0_1, %c0_2] : memref<128x128xf32, #tpu.memory_space<vmem>>, vector<128x128xf32>
    %c0_3 = arith.constant 0 : index
    %c0_4 = arith.constant 0 : index
    %2 = vector.load %arg3[%c0_3, %c0_4] : memref<1x128xf32, #tpu.memory_space<vmem>>, vector<1x128xf32>
    %cst = arith.constant dense<0.000000e+00> : vector<8x128xf32>
    %3 = tpu.matmul %0, %1, %cst {dimension_numbers = #tpu.dot_dimension_numbers<[1], [0], [0], [1], [0, 0, 1, 1], [], []>} : vector<8x128xf32>, vector<128x128xf32>, vector<8x128xf32> -> vector<8x128xf32>
    %4 = vector.broadcast %2 : vector<1x128xf32> to vector<8x128xf32>
    %5 = arith.addf %3, %4 : vector<8x128xf32>
    %cst_5 = arith.constant 0.00999999977 : f32
    %6 = vector.broadcast %cst_5 : f32 to vector<8x128xf32>
    %7 = arith.mulf %6, %5 : vector<8x128xf32>
    %8 = arith.maximumf %5, %7 : vector<8x128xf32>
    %c0_6 = arith.constant 0 : index
    %c0_7 = arith.constant 0 : index
    %9 = vector.load %arg4[%c0_6, %c0_7] : memref<128x128xf32, #tpu.memory_space<vmem>>, vector<128x128xf32>
    %c0_8 = arith.constant 0 : index
    %c0_9 = arith.constant 0 : index
    %10 = vector.load %arg5[%c0_8, %c0_9] : memref<1x128xf32, #tpu.memory_space<vmem>>, vector<1x128xf32>
    %cst_10 = arith.constant dense<0.000000e+00> : vector<8x128xf32>
    %11 = tpu.matmul %8, %9, %cst_10 {dimension_numbers = #tpu.dot_dimension_numbers<[1], [0], [0], [1], [0, 0, 1, 1], [], []>} : vector<8x128xf32>, vector<128x128xf32>, vector<8x128xf32> -> vector<8x128xf32>
    %12 = vector.broadcast %10 : vector<1x128xf32> to vector<8x128xf32>
    %13 = arith.addf %11, %12 : vector<8x128xf32>
    %cst_11 = arith.constant 0.00999999977 : f32
    %14 = vector.broadcast %cst_11 : f32 to vector<8x128xf32>
    %15 = arith.mulf %14, %13 : vector<8x128xf32>
    %16 = arith.maximumf %13, %15 : vector<8x128xf32>
    %c0_12 = arith.constant 0 : index
    %c0_13 = arith.constant 0 : index
    %17 = vector.load %arg6[%c0_12, %c0_13] : memref<128x128xf32, #tpu.memory_space<vmem>>, vector<128x128xf32>
    %c0_14 = arith.constant 0 : index
    %c0_15 = arith.constant 0 : index
    %18 = vector.load %arg7[%c0_14, %c0_15] : memref<1x128xf32, #tpu.memory_space<vmem>>, vector<1x128xf32>
    %cst_16 = arith.constant dense<0.000000e+00> : vector<8x128xf32>
    %19 = tpu.matmul %16, %17, %cst_16 {dimension_numbers = #tpu.dot_dimension_numbers<[1], [0], [0], [1], [0, 0, 1, 1], [], []>} : vector<8x128xf32>, vector<128x128xf32>, vector<8x128xf32> -> vector<8x128xf32>
    %20 = vector.broadcast %18 : vector<1x128xf32> to vector<8x128xf32>
    %21 = arith.addf %19, %20 : vector<8x128xf32>
    %c0_17 = arith.constant 0 : index
    %c0_18 = arith.constant 0 : index
    %22 = vector.load %arg8[%c0_17, %c0_18] : memref<8x128xf32, #tpu.memory_space<vmem>>, vector<8x128xf32>
    tpu.vector_store %arg8[%c0_17, %c0_18], %21 {strides = array<i32>} : memref<8x128xf32, #tpu.memory_space<vmem>>, vector<8x128xf32>,
    return
  }
  func.func @transform_0(%arg0: i32) -> (i32, i32) {
    %c0_i32 = arith.constant 0 : i32
    %c0_i32_0 = arith.constant 0 : i32
    return %arg0, %c0_i32 : i32, i32
  }
  func.func @transform_1(%arg0: i32) -> (i32, i32) {
    %c0_i32 = arith.constant 0 : i32
    %c0_i32_0 = arith.constant 0 : i32
    %c0_i32_1 = arith.constant 0 : i32
    return %c0_i32, %c0_i32_0 : i32, i32
  }
  func.func @transform_2(%arg0: i32) -> (i32, i32) {
    %c0_i32 = arith.constant 0 : i32
    %c0_i32_0 = arith.constant 0 : i32
    %c0_i32_1 = arith.constant 0 : i32
    return %c0_i32, %c0_i32_0 : i32, i32
  }
  func.func @transform_3(%arg0: i32) -> (i32, i32) {
    %c0_i32 = arith.constant 0 : i32
    %c0_i32_0 = arith.constant 0 : i32
    %c0_i32_1 = arith.constant 0 : i32
    return %c0_i32, %c0_i32_0 : i32, i32
  }
  func.func @transform_4(%arg0: i32) -> (i32, i32) {
    %c0_i32 = arith.constant 0 : i32
    %c0_i32_0 = arith.constant 0 : i32
    %c0_i32_1 = arith.constant 0 : i32
    return %c0_i32, %c0_i32_0 : i32, i32
  }
  func.func @transform_5(%arg0: i32) -> (i32, i32) {
    %c0_i32 = arith.constant 0 : i32
    %c0_i32_0 = arith.constant 0 : i32
    %c0_i32_1 = arith.constant 0 : i32
    return %c0_i32, %c0_i32_0 : i32, i32
  }
  func.func @transform_6(%arg0: i32) -> (i32, i32) {
    %c0_i32 = arith.constant 0 : i32
    %c0_i32_0 = arith.constant 0 : i32
    %c0_i32_1 = arith.constant 0 : i32
    return %c0_i32, %c0_i32_0 : i32, i32
  }
  func.func @transform_7(%arg0: i32) -> (i32, i32) {
    %c0_i32 = arith.constant 0 : i32
    %c0_i32_0 = arith.constant 0 : i32
    return %arg0, %c0_i32 : i32, i32
  }
}

</mosaic_0001>

<llo_original>
// kernel: tpu_custom_call.1
$region0: #{tpu_custom_call.1}
  #allocation0 [shape = 'u32[]', space=smem, size = 0x4, offset = 0x4, fixed_abs, tag = 'smem constant byte address 0x4 - core index']
  #allocation1 [shape = 'u32[72,128]{1,0:T(1,128)}', space=vmem, size = 0x9000, scoped, tag = 'internal scratch']
  %s0 = inlined_call_operand.hbm [shape: f32[8,128], index: 0, kind: input, shape index: {}]
  %s1 = inlined_call_operand.hbm [shape: f32[128,128], index: 1, kind: input, shape index: {}]
  %s2 = inlined_call_operand.vmem [shape: f32[1,128], index: 2, kind: input, shape index: {}]
  %s3 = inlined_call_operand.hbm [shape: f32[128,128], index: 3, kind: input, shape index: {}]
  %s4 = inlined_call_operand.vmem [shape: f32[1,128], index: 4, kind: input, shape index: {}]
  %s5 = inlined_call_operand.hbm [shape: f32[128,128], index: 5, kind: input, shape index: {}]
  %s6 = inlined_call_operand.vmem [shape: f32[1,128], index: 6, kind: input, shape index: {}]
  %s7 = inlined_call_operand.hbm [shape: f32[8,128], index: 7, kind: output, shape index: {}]
  %s8 = sld [smem:[#allocation0]]
  $region54: #{tpu_custom_call.1} parent=0
    _
  %s10 = ssub.s32 1, %s8
  %s11 = scalar_select 0, %s10, %s8
  $region1: #{tpu_custom_call.1} parent=0
    #allocation2 [shape = 'u8[4096]{0}', space=vmem, size = 0x1000, scoped, tag = 'input window, operand 0, single buffered']
    #allocation3 [shape = 's32[1]{0}', space=sflag, size = 0x4, scoped, tag = 'scoped memory for tpu_custom_call.1']
    #allocation4 [shape = 's32[1]{0}', space=sflag, size = 0x4, scoped, tag = 'scoped memory for tpu_custom_call.1']
    #allocation5 [shape = 'u8[65536]{0}', space=vmem, size = 0x10000, scoped, tag = 'input window, operand 1, single buffered']
    #allocation6 [shape = 's32[1]{0}', space=sflag, size = 0x4, scoped, tag = 'scoped memory for tpu_custom_call.1']
    #allocation7 [shape = 'u8[65536]{0}', space=vmem, size = 0x10000, scoped, tag = 'input window, operand 3, single buffered']
    #allocation8 [shape = 'u8[65536]{0}', space=vmem, size = 0x10000, scoped, tag = 'input window, operand 5, single buffered']
    #allocation9 [shape = 's32[1]{0}', space=sflag, size = 0x4, scoped, tag = 'scoped memory for tpu_custom_call.1']
    #allocation10 [shape = 'u8[4096]{0}', space=vmem, size = 0x1000, scoped, tag = 'output window, operand 0, single buffered']
    %12 = vsyncpa [#allocation3], 0
    %13 = vsyncpa [#allocation6], 0
    %14 = vsyncpa [#allocation9], 0
    %15 = vsyncpa [#allocation4], 0
    // Predicated region
    $region2: #{tpu_custom_call.1} parent=1 // pred_check
      _
    $region3: #{tpu_custom_call.1} parent=1 // pred_check_branch
      %17 = sbr.rel (0) target = $region5
    $region4: #{tpu_custom_call.1} parent=1 // pred_region
      %19 = vsyncadd [#allocation3], 0
      %s21 = sshll.u32 %s0, 4
      %s22 = int_to_ptr.hbm [resolvable:$true] %s21
      %s23 = sshll.u32 [#allocation2], 4
      %s24 = int_to_ptr.vmem [resolvable:$true] %s23
      %26 = dma.hbm_to_vmem [thread:$0]  %s22, 128, %s24, [#allocation3]
    $region5: #{tpu_custom_call.1} parent=1 // pred_fallthru
      _
    // Predicated region
    $region6: #{tpu_custom_call.1} parent=1 // pred_check
      _
    $region7: #{tpu_custom_call.1} parent=1 // pred_check_branch
      %28 = sbr.rel (0) target = $region9
    $region8: #{tpu_custom_call.1} parent=1 // pred_region
      %30 = vsyncadd [#allocation6], 0
      %s31 = sshll.u32 %s1, 4
      %s32 = int_to_ptr.hbm [resolvable:$true] %s31
      %s33 = sshll.u32 [#allocation5], 4
      %s34 = int_to_ptr.vmem [resolvable:$true] %s33
      %39 = dma.hbm_to_vmem [thread:$0]  %s32, 2048, %s34, [#allocation6], 128, 128, 8
    $region9: #{tpu_custom_call.1} parent=1 // pred_fallthru
      _
    // Predicated region
    $region10: #{tpu_custom_call.1} parent=1 // pred_check
      _
    $region11: #{tpu_custom_call.1} parent=1 // pred_check_branch
      %41 = sbr.rel (0) target = $region13
    $region12: #{tpu_custom_call.1} parent=1 // pred_region
      _
    $region13: #{tpu_custom_call.1} parent=1 // pred_fallthru
      _
    // Predicated region
    $region14: #{tpu_custom_call.1} parent=1 // pred_check
      _
    $region15: #{tpu_custom_call.1} parent=1 // pred_check_branch
      %43 = sbr.rel (0) target = $region17
    $region16: #{tpu_custom_call.1} parent=1 // pred_region
      %45 = vsyncadd [#allocation6], 0
      %s46 = sshll.u32 %s3, 4
      %s47 = int_to_ptr.hbm [resolvable:$true] %s46
      %s48 = sshll.u32 [#allocation7], 4
      %s49 = int_to_ptr.vmem [resolvable:$true] %s48
      %54 = dma.hbm_to_vmem [thread:$0]  %s47, 2048, %s49, [#allocation6], 128, 128, 8
    $region17: #{tpu_custom_call.1} parent=1 // pred_fallthru
      _
    // Predicated region
    $region18: #{tpu_custom_call.1} parent=1 // pred_check
      _
    $region19: #{tpu_custom_call.1} parent=1 // pred_check_branch
      %56 = sbr.rel (0) target = $region21
    $region20: #{tpu_custom_call.1} parent=1 // pred_region
      _
    $region21: #{tpu_custom_call.1} parent=1 // pred_fallthru
      _
    // Predicated region
    $region22: #{tpu_custom_call.1} parent=1 // pred_check
      _
    $region23: #{tpu_custom_call.1} parent=1 // pred_check_branch
      %58 = sbr.rel (0) target = $region25
    $region24: #{tpu_custom_call.1} parent=1 // pred_region
      %60 = vsyncadd [#allocation9], 0
      %s61 = sshll.u32 %s5, 4
      %s62 = int_to_ptr.hbm [resolvable:$true] %s61
      %s63 = sshll.u32 [#allocation8], 4
      %s64 = int_to_ptr.vmem [resolvable:$true] %s63
      %69 = dma.hbm_to_vmem [thread:$0]  %s62, 2048, %s64, [#allocation9], 128, 128, 8
    $region25: #{tpu_custom_call.1} parent=1 // pred_fallthru
      _
    // Predicated region
    $region26: #{tpu_custom_call.1} parent=1 // pred_check
      _
    $region27: #{tpu_custom_call.1} parent=1 // pred_check_branch
      %71 = sbr.rel (0) target = $region29
    $region28: #{tpu_custom_call.1} parent=1 // pred_region
      _
    $region29: #{tpu_custom_call.1} parent=1 // pred_fallthru
      _
    // Predicated region
    $region30: #{tpu_custom_call.1} parent=1 // pred_check
      _
    $region31: #{tpu_custom_call.1} parent=1 // pred_check_branch
      %73 = sbr.rel (0) target = $region33
    $region32: #{tpu_custom_call.1} parent=1 // pred_region
      %75 = dma.done [#allocation3], 128
    $region33: #{tpu_custom_call.1} parent=1 // pred_fallthru
      _
    // Predicated region
    $region34: #{tpu_custom_call.1} parent=1 // pred_check
      _
    $region35: #{tpu_custom_call.1} parent=1 // pred_check_branch
      %77 = sbr.rel (0) target = $region37
    $region36: #{tpu_custom_call.1} parent=1 // pred_region
      %79 = dma.done [#allocation6], 2048
    $region37: #{tpu_custom_call.1} parent=1 // pred_fallthru
      _
    // Predicated region
    $region38: #{tpu_custom_call.1} parent=1 // pred_check
      _
    $region39: #{tpu_custom_call.1} parent=1 // pred_check_branch
      %81 = sbr.rel (0) target = $region41
    $region40: #{tpu_custom_call.1} parent=1 // pred_region
      %83 = dma.done [#allocation6], 2048
    $region41: #{tpu_custom_call.1} parent=1 // pred_fallthru
      _
    // Predicated region
    $region42: #{tpu_custom_call.1} parent=1 // pred_check
      _
    $region43: #{tpu_custom_call.1} parent=1 // pred_check_branch
      %85 = sbr.rel (0) target = $region45
    $region44: #{tpu_custom_call.1} parent=1 // pred_region
      %87 = dma.done [#allocation9], 2048
    $region45: #{tpu_custom_call.1} parent=1 // pred_fallthru
      _
    %v88 = vld [vmem:[#allocation2] sm:$0xff]
    %v89 = vld [vmem:[#allocation5] sm:$0xff]
    %v90 = vld [vmem:[#allocation5 + $0x8] sm:$0xff]
    %v91 = vld [vmem:[#allocation5 + $0x10] sm:$0xff]
    %v92 = vld [vmem:[#allocation5 + $0x18] sm:$0xff]
    %v93 = vld [vmem:[#allocation5 + $0x20] sm:$0xff]
    %v94 = vld [vmem:[#allocation5 + $0x28] sm:$0xff]
    %v95 = vld [vmem:[#allocation5 + $0x30] sm:$0xff]
    %v96 = vld [vmem:[#allocation5 + $0x38] sm:$0xff]
    %v97 = vld [vmem:[#allocation5 + $0x40] sm:$0xff]
    %v98 = vld [vmem:[#allocation5 + $0x48] sm:$0xff]
    %v99 = vld [vmem:[#allocation5 + $0x50] sm:$0xff]
    %v100 = vld [vmem:[#allocation5 + $0x58] sm:$0xff]
    %v101 = vld [vmem:[#allocation5 + $0x60] sm:$0xff]
    %v102 = vld [vmem:[#allocation5 + $0x68] sm:$0xff]
    %v103 = vld [vmem:[#allocation5 + $0x70] sm:$0xff]
    %v104 = vld [vmem:[#allocation5 + $0x78] sm:$0xff]
    %v105 = vld [vmem:[%s2] sm:$0x1]
    %v107 = vperm.slane %v105, 0
    %109 = vmatpush.msra.mxu0 %v104
    %110 = vmatpush.msra.mxu0 %v103
    %111 = vmatpush.msra.mxu0 %v102
    %112 = vmatpush.msra.mxu0 %v101
    %113 = vmatpush.msra.mxu0 %v100
    %114 = vmatpush.msra.mxu0 %v99
    %115 = vmatpush.msra.mxu0 %v98
    %116 = vmatpush.msra.mxu0 %v97
    %117 = vmatpush.msra.mxu0 %v96
    %118 = vmatpush.msra.mxu0 %v95
    %119 = vmatpush.msra.mxu0 %v94
    %120 = vmatpush.msra.mxu0 %v93
    %121 = vmatpush.msra.mxu0 %v92
    %122 = vmatpush.msra.mxu0 %v91
    %123 = vmatpush.msra.mxu0 %v90
    %124 = vmatpush.msra.mxu0 %v89
    %125 = vmatmul.f32.gmra.mxu0 %v88
    %v126 = vpop.f32.mrf.mxu0
    %v127 = vadd.f32 %v107, %v126
    %128 = vdwg.mxu0
    %v129 = vmul.f32 %v127, 0.01
    %v130 = vmax.f32 %v127, %v129
    %v131 = vld [vmem:[#allocation7] sm:$0xff]
    %v132 = vld [vmem:[#allocation7 + $0x8] sm:$0xff]
    %v133 = vld [vmem:[#allocation7 + $0x10] sm:$0xff]
    %v134 = vld [vmem:[#allocation7 + $0x18] sm:$0xff]
    %v135 = vld [vmem:[#allocation7 + $0x20] sm:$0xff]
    %v136 = vld [vmem:[#allocation7 + $0x28] sm:$0xff]
    %v137 = vld [vmem:[#allocation7 + $0x30] sm:$0xff]
    %v138 = vld [vmem:[#allocation7 + $0x38] sm:$0xff]
    %v139 = vld [vmem:[#allocation7 + $0x40] sm:$0xff]
    %v140 = vld [vmem:[#allocation7 + $0x48] sm:$0xff]
    %v141 = vld [vmem:[#allocation7 + $0x50] sm:$0xff]
    %v142 = vld [vmem:[#allocation7 + $0x58] sm:$0xff]
    %v143 = vld [vmem:[#allocation7 + $0x60] sm:$0xff]
    %v144 = vld [vmem:[#allocation7 + $0x68] sm:$0xff]
    %v145 = vld [vmem:[#allocation7 + $0x70] sm:$0xff]
    %v146 = vld [vmem:[#allocation7 + $0x78] sm:$0xff]
    %v147 = vld [vmem:[%s4] sm:$0x1]
    %v149 = vperm.slane %v147, 0
    %151 = vmatpush.msra.mxu0 %v146
    %152 = vmatpush.msra.mxu0 %v145
    %153 = vmatpush.msra.mxu0 %v144
    %154 = vmatpush.msra.mxu0 %v143
    %155 = vmatpush.msra.mxu0 %v142
    %156 = vmatpush.msra.mxu0 %v141
    %157 = vmatpush.msra.mxu0 %v140
    %158 = vmatpush.msra.mxu0 %v139
    %159 = vmatpush.msra.mxu0 %v138
    %160 = vmatpush.msra.mxu0 %v137
    %161 = vmatpush.msra.mxu0 %v136
    %162 = vmatpush.msra.mxu0 %v135
    %163 = vmatpush.msra.mxu0 %v134
    %164 = vmatpush.msra.mxu0 %v133
    %165 = vmatpush.msra.mxu0 %v132
    %166 = vmatpush.msra.mxu0 %v131
    %167 = vmatmul.f32.gmra.mxu0 %v130
    %v168 = vpop.f32.mrf.mxu0
    %v169 = vadd.f32 %v149, %v168
    %170 = vdwg.mxu0
    %v171 = vmul.f32 %v169, 0.01
    %v172 = vmax.f32 %v169, %v171
    %v173 = vld [vmem:[#allocation8] sm:$0xff]
    %v174 = vld [vmem:[#allocation8 + $0x8] sm:$0xff]
    %v175 = vld [vmem:[#allocation8 + $0x10] sm:$0xff]
    %v176 = vld [vmem:[#allocation8 + $0x18] sm:$0xff]
    %v177 = vld [vmem:[#allocation8 + $0x20] sm:$0xff]
    %v178 = vld [vmem:[#allocation8 + $0x28] sm:$0xff]
    %v179 = vld [vmem:[#allocation8 + $0x30] sm:$0xff]
    %v180 = vld [vmem:[#allocation8 + $0x38] sm:$0xff]
    %v181 = vld [vmem:[#allocation8 + $0x40] sm:$0xff]
    %v182 = vld [vmem:[#allocation8 + $0x48] sm:$0xff]
    %v183 = vld [vmem:[#allocation8 + $0x50] sm:$0xff]
    %v184 = vld [vmem:[#allocation8 + $0x58] sm:$0xff]
    %v185 = vld [vmem:[#allocation8 + $0x60] sm:$0xff]
    %v186 = vld [vmem:[#allocation8 + $0x68] sm:$0xff]
    %v187 = vld [vmem:[#allocation8 + $0x70] sm:$0xff]
    %v188 = vld [vmem:[#allocation8 + $0x78] sm:$0xff]
    %v189 = vld [vmem:[%s6] sm:$0x1]
    %v191 = vperm.slane %v189, 0
    %193 = vmatpush.msra.mxu0 %v188
    %194 = vmatpush.msra.mxu0 %v187
    %195 = vmatpush.msra.mxu0 %v186
    %196 = vmatpush.msra.mxu0 %v185
    %197 = vmatpush.msra.mxu0 %v184
    %198 = vmatpush.msra.mxu0 %v183
    %199 = vmatpush.msra.mxu0 %v182
    %200 = vmatpush.msra.mxu0 %v181
    %201 = vmatpush.msra.mxu0 %v180
    %202 = vmatpush.msra.mxu0 %v179
    %203 = vmatpush.msra.mxu0 %v178
    %204 = vmatpush.msra.mxu0 %v177
    %205 = vmatpush.msra.mxu0 %v176
    %206 = vmatpush.msra.mxu0 %v175
    %207 = vmatpush.msra.mxu0 %v174
    %208 = vmatpush.msra.mxu0 %v173
    %209 = vmatmul.f32.gmra.mxu0 %v172
    %v210 = vpop.f32.mrf.mxu0
    %v211 = vadd.f32 %v191, %v210
    %212 = vdwg.mxu0
    %213 = vst [vmem:[#allocation10] sm:$0xff] %v211
    // Predicated region
    $region46: #{tpu_custom_call.1} parent=1 // pred_check
      _
    $region47: #{tpu_custom_call.1} parent=1 // pred_check_branch
      %215 = sbr.rel (0) target = $region49
    $region48: #{tpu_custom_call.1} parent=1 // pred_region
      %217 = vsyncadd [#allocation4], 0
      %s219 = sshll.u32 [#allocation10], 4
      %s220 = int_to_ptr.vmem [resolvable:$true] %s219
      %s221 = sshll.u32 %s7, 4
      %s222 = int_to_ptr.hbm [resolvable:$true] %s221
      %224 = dma.vmem_to_hbm [thread:$0]  %s220, 128, %s222, [#allocation4]
    $region49: #{tpu_custom_call.1} parent=1 // pred_fallthru
      _
    // Predicated region
    $region50: #{tpu_custom_call.1} parent=1 // pred_check
      _
    $region51: #{tpu_custom_call.1} parent=1 // pred_check_branch
      %226 = sbr.rel (0) target = $region53
    $region52: #{tpu_custom_call.1} parent=1 // pred_region
      %228 = dma.done [#allocation4], 128
    $region53: #{tpu_custom_call.1} parent=1 // pred_fallthru
      _
    %229 = vsyncpa [#allocation3], 1
    %230 = vsyncpa [#allocation6], 1
    %231 = vsyncpa [#allocation9], 1
    %232 = vsyncpa [#allocation4], 1

</llo_original>
